<compile_context>
chip_gen: v5e
topology: v5e:2x2
jax: 0.10.0
libtpu: 0.0.40
codegen_flags: <defaults>
</compile_context>

<pallas_src>
import functools

import jax
import jax.numpy as jnp
from jax.experimental import pallas as pl
from jax.experimental.pallas import tpu as pltpu


# ---------------------------------------------------------------------------
# Fused kernel: base Linear+ReLU -> dropout(0.5) -> sampled-class Linear
# ---------------------------------------------------------------------------
def fused_hnsw_kernel(seed_ref, blk_ref,            # scalar-prefetch (SMEM)
                      x_ref, bw_ref, bb_ref,        # inputs (VMEM)
                      cw_ref, cb_ref,
                      logits_ref, featdrop_ref):    # outputs (VMEM)
    # base: feat = relu(x @ Wb + bb)  — bf16 MXU operands, f32 accumulation.
    feat = jnp.dot(x_ref[...], bw_ref[...], preferred_element_type=jnp.float32)
    feat = jnp.maximum(feat + bb_ref[...], 0.0)

    # dropout p=0.5 (training mode).  Counter-based hash mask generated
    # on-chip with plain integer VPU ops (portable: Mosaic + interpret).
    # Per-tile seed so batch tiling never repeats a mask.
    seed = (seed_ref[0] + pl.program_id(0)).astype(jnp.uint32)
    rows = jax.lax.broadcasted_iota(jnp.int32, feat.shape, 0).astype(jnp.uint32)
    cols = jax.lax.broadcasted_iota(jnp.int32, feat.shape, 1).astype(jnp.uint32)
    h = seed * jnp.uint32(0x9E3779B9)
    h = h + rows * jnp.uint32(0x85EBCA6B) + cols * jnp.uint32(0xC2B2AE35)
    h = h ^ (h >> jnp.uint32(16))
    h = h * jnp.uint32(0x7FEB352D)
    h = h ^ (h >> jnp.uint32(15))
    h = h * jnp.uint32(0x846CA68B)
    h = h ^ (h >> jnp.uint32(16))
    keep = (h & jnp.uint32(0x80000000)) != jnp.uint32(0)   # Bernoulli(0.5)

    # Fused inverted-dropout select (f32 VPU math): keep -> 2*feat, drop -> 0.
    feat_drop = jnp.where(keep, feat * 2.0, 0.0)

    # sampled-class linear: logits = feat_drop @ Wc_blk + bc_blk
    # (activation cast to bf16 for the MXU, accumulate in f32).
    logits = jnp.dot(feat_drop.astype(jnp.bfloat16), cw_ref[...],
                     preferred_element_type=jnp.float32)
    logits_ref[...] = logits + cb_ref[...]
    featdrop_ref[...] = feat_drop                    # exposed for bwd / checks


def fused_forward(seed, blk_idx, x, base_wT, base_b, class_wT, class_b,
                  sampler_num):
    B, IN = x.shape
    FEAT = base_wT.shape[1]
    S = sampler_num

    # bf16 MXU operands at the call boundary (halves weight DMA bytes).
    x_bf = x.astype(jnp.bfloat16)
    bw_bf = base_wT.astype(jnp.bfloat16)
    cw_bf = class_wT.astype(jnp.bfloat16)

    grid_spec = pltpu.PrefetchScalarGridSpec(
        num_scalar_prefetch=2,          # (seed, block_idx) land in SMEM
        grid=(1,),
        in_specs=[
            pl.BlockSpec((B, IN), lambda i, seed, blk: (0, 0)),
            pl.BlockSpec((IN, FEAT), lambda i, seed, blk: (0, 0)),
            pl.BlockSpec((1, FEAT), lambda i, seed, blk: (0, 0)),
            # Sampled-class block selected by the scalar-prefetched index:
            # the gather is part of this kernel's DMA, no HBM intermediate.
            # TODO(synk): non-contiguous HNSW class ids need a per-row gather
            # (class-major layout + pl.Element index_map or manual DMA).
            pl.BlockSpec((FEAT, S), lambda i, seed, blk: (0, blk[0])),
            pl.BlockSpec((1, S), lambda i, seed, blk: (0, blk[0])),
        ],
        out_specs=[
            pl.BlockSpec((B, S), lambda i, seed, blk: (0, 0)),
            pl.BlockSpec((B, FEAT), lambda i, seed, blk: (0, 0)),
        ],
    )

    cost = pl.CostEstimate(
        flops=2 * B * IN * FEAT + 2 * B * FEAT * S,
        transcendentals=0,
        bytes_accessed=(x_bf.size * 2 + bw_bf.size * 2 + base_b.size * 4
                        + FEAT * S * 2 + S * 4
                        + B * S * 4 + B * FEAT * 4),
    )

    return pl.pallas_call(
        fused_hnsw_kernel,
        out_shape=(jax.ShapeDtypeStruct((B, S), jnp.float32),
                   jax.ShapeDtypeStruct((B, FEAT), jnp.float32)),
        grid_spec=grid_spec,
        cost_estimate=cost,
        compiler_params=pltpu.CompilerParams(
            dimension_semantics=("arbitrary",)),
    )(seed, blk_idx, x_bf, bw_bf, base_b, cw_bf, class_b)


# ---------------------------------------------------------------------------
# HNSW sampler (glue): pick which SAMPLER_NUM-wide class block to use.
# ---------------------------------------------------------------------------
def hnsw_sampler(labels, sampler_num):
    # TODO(synk): real HNSW approximate-NN negative mining over class weight
    # vectors; placeholder selects block 0 (first SAMPLER_NUM classes) and
    # keeps labels unremapped (labels already < sampler_num).
    blk_idx = jnp.zeros((1,), dtype=jnp.int32)
    return blk_idx, labels


@functools.partial(jax.jit, static_argnames=("sampler_num",))
def hnsw_classifier_forward(x, labels, params, seed, sampler_num):
    blk_idx, labels = hnsw_sampler(labels, sampler_num)
    logits, feat_drop = fused_forward(
        seed, blk_idx, x,
        params["base_wT"], params["base_b"],
        params["class_wT"], params["class_b"],
        sampler_num)
    return logits, labels, feat_drop


# ---------------------------------------------------------------------------
# Main
# ---------------------------------------------------------------------------
if __name__ == "__main__":
    B = 16           # batch (sublane-aligned for bf16 tiles)
    IN_DIM = 256     # input feature dim consumed by `base`
    FEAT = 128       # feature_dim
    SAMPLER_NUM = 128
    NUM_CLASSES = 256

    key = jax.random.PRNGKey(0)
    k_x, k_bw, k_bb, k_cw, k_cb, k_lab = jax.random.split(key, 6)

    x = jax.random.normal(k_x, (B, IN_DIM), dtype=jnp.float32)
    labels = jax.random.randint(k_lab, (B,), 0, SAMPLER_NUM, dtype=jnp.int32)

    # Weights stored pre-transposed (kernel-friendly layout, same math).
    params = {
        "base_wT": jax.random.normal(k_bw, (IN_DIM, FEAT), jnp.float32) * 0.05,
        "base_b": jax.random.normal(k_bb, (1, FEAT), jnp.float32) * 0.01,
        "class_wT": jax.random.normal(k_cw, (FEAT, NUM_CLASSES), jnp.float32) * 0.05,
        "class_b": jax.random.normal(k_cb, (1, NUM_CLASSES), jnp.float32) * 0.01,
    }

    seed = jnp.array([42], dtype=jnp.int32)

    logits, out_labels, feat_drop = hnsw_classifier_forward(
        x, labels, params, seed, sampler_num=SAMPLER_NUM)
    jax.block_until_ready((logits, out_labels, feat_drop))

    # ---- correctness checks (pure-JAX reference, same bf16 operand cast) ---
    assert logits.shape == (B, SAMPLER_NUM)
    assert feat_drop.shape == (B, FEAT)

    x_bf = x.astype(jnp.bfloat16)
    bw_bf = params["base_wT"].astype(jnp.bfloat16)
    cw_bf = params["class_wT"].astype(jnp.bfloat16)

    # base + relu reference; each dropped-feature element must be either 0
    # (dropped, or relu-zeroed) or ~2 * relu-feature (kept, p=0.5 scaling).
    feat_ref = jnp.maximum(
        jnp.dot(x_bf, bw_bf, preferred_element_type=jnp.float32)
        + params["base_b"], 0.0)
    kept = jnp.isclose(feat_drop, 2.0 * feat_ref, atol=2e-2, rtol=2e-2)
    dropped = jnp.abs(feat_drop) <= 1e-6
    assert bool(jnp.all(kept | dropped))
    # mask should be roughly balanced (Bernoulli(0.5) sanity check)
    keep_frac = float(jnp.mean((feat_drop != 0.0).astype(jnp.float32)))
    assert 0.2 < keep_frac < 0.8

    # sampled-class linear reference (block 0 = first SAMPLER_NUM classes).
    w_blk = cw_bf[:, :SAMPLER_NUM]
    b_blk = params["class_b"][:, :SAMPLER_NUM]
    logits_ref = jnp.dot(feat_drop.astype(jnp.bfloat16), w_blk,
                         preferred_element_type=jnp.float32) + b_blk
    assert jnp.allclose(logits, logits_ref, atol=2e-2, rtol=2e-2)
    assert jnp.array_equal(out_labels, labels)

    print("KERNEL_OK")
</pallas_src>

<mosaic_0001>
module attributes {stable_mosaic.version = 11 : i64} {
  func.func @fused_hnsw_kernel(%arg0: i32, %arg1: memref<1xi32, #tpu.memory_space<smem>>, %arg2: memref<1xi32, #tpu.memory_space<smem>>, %arg3: memref<16x256xbf16, #tpu.memory_space<vmem>>, %arg4: memref<256x128xbf16, #tpu.memory_space<vmem>>, %arg5: memref<1x128xf32, #tpu.memory_space<vmem>>, %arg6: memref<128x128xbf16, #tpu.memory_space<vmem>>, %arg7: memref<1x128xf32, #tpu.memory_space<vmem>>, %arg8: memref<16x128xf32, #tpu.memory_space<vmem>>, %arg9: memref<16x128xf32, #tpu.memory_space<vmem>>) attributes {dimension_semantics = [#tpu.dimension_semantics<arbitrary>], iteration_bounds = array<i64: 1>, scalar_prefetch = 2 : i64, scratch_operands = 0 : i64, tpu.core_type = #tpu.core_type<tc>, window_params = [{pipeline_mode = #tpu.pipeline_mode<synchronous>, transform_indices = @transform_0, window_bounds = array<i64: 16, 256>}, {pipeline_mode = #tpu.pipeline_mode<synchronous>, transform_indices = @transform_1, window_bounds = array<i64: 256, 128>}, {pipeline_mode = #tpu.pipeline_mode<synchronous>, transform_indices = @transform_2, window_bounds = array<i64: 1, 128>}, {transform_indices = @transform_3, window_bounds = array<i64: 128, 128>}, {transform_indices = @transform_4, window_bounds = array<i64: 1, 128>}, {pipeline_mode = #tpu.pipeline_mode<synchronous>, transform_indices = @transform_5, window_bounds = array<i64: 16, 128>}, {pipeline_mode = #tpu.pipeline_mode<synchronous>, transform_indices = @transform_6, window_bounds = array<i64: 16, 128>}]} {
    %c0 = arith.constant 0 : index
    %c0_0 = arith.constant 0 : index
    %0 = vector.load %arg3[%c0, %c0_0] : memref<16x256xbf16, #tpu.memory_space<vmem>>, vector<16x256xbf16>
    %c0_1 = arith.constant 0 : index
    %c0_2 = arith.constant 0 : index
    %1 = vector.load %arg4[%c0_1, %c0_2] : memref<256x128xbf16, #tpu.memory_space<vmem>>, vector<256x128xbf16>
    %cst = arith.constant dense<0.000000e+00> : vector<16x128xf32>
    %2 = tpu.matmul %0, %1, %cst {dimension_numbers = #tpu.dot_dimension_numbers<[1], [0], [0], [1], [0, 0, 1, 1], [], []>} : vector<16x256xbf16>, vector<256x128xbf16>, vector<16x128xf32> -> vector<16x128xf32>
    %c0_3 = arith.constant 0 : index
    %c0_4 = arith.constant 0 : index
    %3 = vector.load %arg5[%c0_3, %c0_4] : memref<1x128xf32, #tpu.memory_space<vmem>>, vector<1x128xf32>
    %4 = vector.broadcast %3 : vector<1x128xf32> to vector<16x128xf32>
    %5 = arith.addf %2, %4 : vector<16x128xf32>
    %cst_5 = arith.constant 0.000000e+00 : f32
    %6 = vector.broadcast %cst_5 : f32 to vector<16x128xf32>
    %7 = arith.maximumf %5, %6 : vector<16x128xf32>
    %c0_6 = arith.constant 0 : index
    %8 = memref.load %arg1[%c0_6] : memref<1xi32, #tpu.memory_space<smem>>
    %9 = arith.addi %8, %arg0 : i32
    %10 = tpu.iota {dimensions = array<i32: 0>} : vector<16x128xi32>
    %11 = tpu.iota {dimensions = array<i32: 1>} : vector<16x128xi32>
    %c-1640531527_i32 = arith.constant -1640531527 : i32
    %12 = arith.muli %9, %c-1640531527_i32 : i32
    %c-2048144789_i32 = arith.constant -2048144789 : i32
    %13 = vector.broadcast %c-2048144789_i32 : i32 to vector<16x128xi32>
    %14 = arith.muli %10, %13 : vector<16x128xi32>
    %15 = vector.broadcast %12 : i32 to vector<16x128xi32>
    %16 = arith.addi %15, %14 : vector<16x128xi32>
    %c-1028477387_i32 = arith.constant -1028477387 : i32
    %17 = vector.broadcast %c-1028477387_i32 : i32 to vector<16x128xi32>
    %18 = arith.muli %11, %17 : vector<16x128xi32>
    %19 = arith.addi %16, %18 : vector<16x128xi32>
    %c16_i32 = arith.constant 16 : i32
    %20 = vector.broadcast %c16_i32 : i32 to vector<16x128xi32>
    %21 = arith.shrui %19, %20 : vector<16x128xi32>
    %22 = arith.xori %19, %21 : vector<16x128xi32>
    %c2146121005_i32 = arith.constant 2146121005 : i32
    %23 = vector.broadcast %c2146121005_i32 : i32 to vector<16x128xi32>
    %24 = arith.muli %22, %23 : vector<16x128xi32>
    %c15_i32 = arith.constant 15 : i32
    %25 = vector.broadcast %c15_i32 : i32 to vector<16x128xi32>
    %26 = arith.shrui %24, %25 : vector<16x128xi32>
    %27 = arith.xori %24, %26 : vector<16x128xi32>
    %c-2073254261_i32 = arith.constant -2073254261 : i32
    %28 = vector.broadcast %c-2073254261_i32 : i32 to vector<16x128xi32>
    %29 = arith.muli %27, %28 : vector<16x128xi32>
    %c16_i32_7 = arith.constant 16 : i32
    %30 = vector.broadcast %c16_i32_7 : i32 to vector<16x128xi32>
    %31 = arith.shrui %29, %30 : vector<16x128xi32>
    %32 = arith.xori %29, %31 : vector<16x128xi32>
    %c-2147483648_i32 = arith.constant -2147483648 : i32
    %33 = vector.broadcast %c-2147483648_i32 : i32 to vector<16x128xi32>
    %34 = arith.andi %32, %33 : vector<16x128xi32>
    %c0_i32 = arith.constant 0 : i32
    %35 = vector.broadcast %c0_i32 : i32 to vector<16x128xi32>
    %36 = arith.cmpi ne, %34, %35 : vector<16x128xi32>
    %cst_8 = arith.constant 2.000000e+00 : f32
    %37 = vector.broadcast %cst_8 : f32 to vector<16x128xf32>
    %38 = arith.mulf %7, %37 : vector<16x128xf32>
    %cst_9 = arith.constant 0.000000e+00 : f32
    %39 = vector.broadcast %cst_9 : f32 to vector<16x128xf32>
    %40 = arith.select %36, %38, %39 : vector<16x128xi1>, vector<16x128xf32>
    %41 = arith.truncf %40 : vector<16x128xf32> to vector<16x128xbf16>
    %c0_10 = arith.constant 0 : index
    %c0_11 = arith.constant 0 : index
    %42 = vector.load %arg6[%c0_10, %c0_11] : memref<128x128xbf16, #tpu.memory_space<vmem>>, vector<128x128xbf16>
    %cst_12 = arith.constant dense<0.000000e+00> : vector<16x128xf32>
    %43 = tpu.matmul %41, %42, %cst_12 {dimension_numbers = #tpu.dot_dimension_numbers<[1], [0], [0], [1], [0, 0, 1, 1], [], []>} : vector<16x128xbf16>, vector<128x128xbf16>, vector<16x128xf32> -> vector<16x128xf32>
    %c0_13 = arith.constant 0 : index
    %c0_14 = arith.constant 0 : index
    %44 = vector.load %arg7[%c0_13, %c0_14] : memref<1x128xf32, #tpu.memory_space<vmem>>, vector<1x128xf32>
    %45 = vector.broadcast %44 : vector<1x128xf32> to vector<16x128xf32>
    %46 = arith.addf %43, %45 : vector<16x128xf32>
    %c0_15 = arith.constant 0 : index
    %c0_16 = arith.constant 0 : index
    %47 = vector.load %arg8[%c0_15, %c0_16] : memref<16x128xf32, #tpu.memory_space<vmem>>, vector<16x128xf32>
    tpu.vector_store %arg8[%c0_15, %c0_16], %46 {strides = array<i32>} : memref<16x128xf32, #tpu.memory_space<vmem>>, vector<16x128xf32>,
    %c0_17 = arith.constant 0 : index
    %c0_18 = arith.constant 0 : index
    %48 = vector.load %arg9[%c0_17, %c0_18] : memref<16x128xf32, #tpu.memory_space<vmem>>, vector<16x128xf32>
    tpu.vector_store %arg9[%c0_17, %c0_18], %40 {strides = array<i32>} : memref<16x128xf32, #tpu.memory_space<vmem>>, vector<16x128xf32>,
    return
  }
  func.func @transform_0(%arg0: i32, %arg1: memref<1xi32, #tpu.memory_space<smem>>, %arg2: memref<1xi32, #tpu.memory_space<smem>>) -> (i32, i32) {
    %c0_i32 = arith.constant 0 : i32
    %c0_i32_0 = arith.constant 0 : i32
    %c0_i32_1 = arith.constant 0 : i32
    return %c0_i32, %c0_i32_0 : i32, i32
  }
  func.func @transform_1(%arg0: i32, %arg1: memref<1xi32, #tpu.memory_space<smem>>, %arg2: memref<1xi32, #tpu.memory_space<smem>>) -> (i32, i32) {
    %c0_i32 = arith.constant 0 : i32
    %c0_i32_0 = arith.constant 0 : i32
    %c0_i32_1 = arith.constant 0 : i32
    return %c0_i32, %c0_i32_0 : i32, i32
  }
  func.func @transform_2(%arg0: i32, %arg1: memref<1xi32, #tpu.memory_space<smem>>, %arg2: memref<1xi32, #tpu.memory_space<smem>>) -> (i32, i32) {
    %c0_i32 = arith.constant 0 : i32
    %c0_i32_0 = arith.constant 0 : i32
    %c0_i32_1 = arith.constant 0 : i32
    return %c0_i32, %c0_i32_0 : i32, i32
  }
  func.func @transform_3(%arg0: i32, %arg1: memref<1xi32, #tpu.memory_space<smem>>, %arg2: memref<1xi32, #tpu.memory_space<smem>>) -> (i32, i32) {
    %c0 = arith.constant 0 : index
    %0 = memref.load %arg2[%c0] : memref<1xi32, #tpu.memory_space<smem>>
    %c0_i32 = arith.constant 0 : i32
    %c0_i32_0 = arith.constant 0 : i32
    return %c0_i32, %0 : i32, i32
  }
  func.func @transform_4(%arg0: i32, %arg1: memref<1xi32, #tpu.memory_space<smem>>, %arg2: memref<1xi32, #tpu.memory_space<smem>>) -> (i32, i32) {
    %c0 = arith.constant 0 : index
    %0 = memref.load %arg2[%c0] : memref<1xi32, #tpu.memory_space<smem>>
    %c0_i32 = arith.constant 0 : i32
    %c0_i32_0 = arith.constant 0 : i32
    return %c0_i32, %0 : i32, i32
  }
  func.func @transform_5(%arg0: i32, %arg1: memref<1xi32, #tpu.memory_space<smem>>, %arg2: memref<1xi32, #tpu.memory_space<smem>>) -> (i32, i32) {
    %c0_i32 = arith.constant 0 : i32
    %c0_i32_0 = arith.constant 0 : i32
    %c0_i32_1 = arith.constant 0 : i32
    return %c0_i32, %c0_i32_0 : i32, i32
  }
  func.func @transform_6(%arg0: i32, %arg1: memref<1xi32, #tpu.memory_space<smem>>, %arg2: memref<1xi32, #tpu.memory_space<smem>>) -> (i32, i32) {
    %c0_i32 = arith.constant 0 : i32
    %c0_i32_0 = arith.constant 0 : i32
    %c0_i32_1 = arith.constant 0 : i32
    return %c0_i32, %c0_i32_0 : i32, i32
  }
}

</mosaic_0001>

<llo_original>
// kernel: hnsw_classifier_forward.1
$region0: #{hnsw_classifier_forward.1}
  #allocation0 [shape = 'u32[]', space=smem, size = 0x4, offset = 0x4, fixed_abs, tag = 'smem constant byte address 0x4 - core index']
  #allocation1 [shape = 'u32[72,128]{1,0:T(1,128)}', space=vmem, size = 0x9000, scoped, tag = 'internal scratch']
  #allocation2 [shape = 's32[1]{0}', space=sflag, size = 0x4, scoped, tag = 'scoped memory for hnsw_classifier_forward.1']
  #allocation3 [shape = 's32[1]{0:T(128)S(6)}', space=smem, size = 0x200, scoped, tag = 'prefetched SMEM operand 0']
  #allocation4 [shape = 's32[1]{0:T(128)S(6)}', space=smem, size = 0x200, scoped, tag = 'prefetched SMEM operand 1']
  %s0 = inlined_call_operand.<no memory space> [shape: s32[1], index: 0, kind: input, shape index: {}]
  %s1 = inlined_call_operand.<no memory space> [shape: s32[1], index: 1, kind: input, shape index: {}]
  %s2 = inlined_call_operand.vmem [shape: bf16[16,256], index: 2, kind: input, shape index: {}]
  %s3 = inlined_call_operand.vmem [shape: bf16[256,128], index: 3, kind: input, shape index: {}]
  %s4 = inlined_call_operand.vmem [shape: f32[1,128], index: 4, kind: input, shape index: {}]
  %s5 = inlined_call_operand.vmem [shape: bf16[128,256], index: 5, kind: input, shape index: {}]
  %s6 = inlined_call_operand.vmem [shape: f32[1,256], index: 6, kind: input, shape index: {}]
  %s7 = inlined_call_operand.hbm [shape: f32[16,128], index: 7, kind: output, shape index: {0}]
  %s8 = inlined_call_operand.hbm [shape: f32[16,128], index: 8, kind: output, shape index: {1}]
  %9 = xla_tuple %s7, %s8
  %s10 = sld [smem:[#allocation0]]
  $region79: #{hnsw_classifier_forward.1} parent=0
    _
  %s12 = ssub.s32 1, %s10
  %s13 = scalar_select 0, %s12, %s10
  %14 = sst [smem:[#allocation3]] %s0
  %15 = sst [smem:[#allocation4]] %s1
  $region1: #{hnsw_classifier_forward.1} parent=0
    #allocation5 [shape = 'u8[32768]{0}', space=vmem, size = 0x8000, scoped, tag = 'input window, operand 5, single buffered']
    #allocation6 [shape = 'u8[8192]{0}', space=vmem, size = 0x2000, scoped, tag = 'output window, operand 0, single buffered']
    #allocation7 [shape = 's32[1]{0}', space=sflag, size = 0x4, scoped, tag = 'scoped memory for hnsw_classifier_forward.1']
    #allocation8 [shape = 'u8[8192]{0}', space=vmem, size = 0x2000, scoped, tag = 'output window, operand 1, single buffered']
    #allocation9 [shape = 's32[1]{0}', space=sflag, size = 0x4, scoped, tag = 'scoped memory for hnsw_classifier_forward.1']
    %16 = vsyncpa [#allocation7], 0
    %17 = vsyncpa [#allocation9], 0
    // Predicated region
    $region2: #{hnsw_classifier_forward.1} parent=1 // pred_check
      _
    $region3: #{hnsw_classifier_forward.1} parent=1 // pred_check_branch
      %19 = sbr.rel (0) target = $region5
    $region4: #{hnsw_classifier_forward.1} parent=1 // pred_region
      _
    $region5: #{hnsw_classifier_forward.1} parent=1 // pred_fallthru
      _
    // Predicated region
    $region6: #{hnsw_classifier_forward.1} parent=1 // pred_check
      _
    $region7: #{hnsw_classifier_forward.1} parent=1 // pred_check_branch
      %21 = sbr.rel (0) target = $region9
    $region8: #{hnsw_classifier_forward.1} parent=1 // pred_region
      _
    $region9: #{hnsw_classifier_forward.1} parent=1 // pred_fallthru
      _
    // Predicated region
    $region10: #{hnsw_classifier_forward.1} parent=1 // pred_check
      _
    $region11: #{hnsw_classifier_forward.1} parent=1 // pred_check_branch
      %23 = sbr.rel (0) target = $region13
    $region12: #{hnsw_classifier_forward.1} parent=1 // pred_region
      _
    $region13: #{hnsw_classifier_forward.1} parent=1 // pred_fallthru
      _
    // Predicated region
    $region14: #{hnsw_classifier_forward.1} parent=1 // pred_check
      _
    $region15: #{hnsw_classifier_forward.1} parent=1 // pred_check_branch
      %25 = sbr.rel (0) target = $region17
    $region16: #{hnsw_classifier_forward.1} parent=1 // pred_region
      %s26 = sld [smem:[#allocation4]]
      %s27 = smul.addr %s26, 4
      %s28 = scalar_lea.vmem %s5, %s27
      // Predicated region
      $region18: #{hnsw_classifier_forward.1} parent=16 // pred_check
        _
      $region19: #{hnsw_classifier_forward.1} parent=16 // pred_check_branch
        %30 = sbr.rel (0) target = $region21
      $region20: #{hnsw_classifier_forward.1} parent=16 // pred_region
        // Predicated region
        $region22: #{hnsw_classifier_forward.1} parent=20 // pred_check
          _
        $region23: #{hnsw_classifier_forward.1} parent=20 // pred_check_branch
          %32 = sbr.rel target = $region25
        $region24: #{hnsw_classifier_forward.1} parent=20 // pred_region
          // Predicated region
          $region37: #{hnsw_classifier_forward.1} parent=24 // pred_check
            _
          $region38: #{hnsw_classifier_forward.1} parent=24 // pred_check_branch
            %78 = sbr.rel (0) target = $region40
          $region39: #{hnsw_classifier_forward.1} parent=24 // pred_region
            loop: start=0, step=1, limit=1
            $region41: #{hnsw_classifier_forward.1} parent=39 // loop_pre_header
              _
            $region42: #{hnsw_classifier_forward.1} parent=39 // loop_header
              %s80 = sphi 0, %s84
              %p81 = scmp.ge.s32.totalorder %s80, 1
              %s85 = sphi %s28, %s28
              %s86 = sphi [#allocation5], [#allocation5]
            $region43: #{hnsw_classifier_forward.1} parent=39 // loop_header_branch
              %83 = sbr.rel (%p81) target = $region47
            $region44: #{hnsw_classifier_forward.1} parent=39 // loop_body
              _
            $region45: #{hnsw_classifier_forward.1} parent=39 // loop_footer
              %s84 = sadd.s32 1, %s80
            $region46: #{hnsw_classifier_forward.1} parent=39 // loop_footer_branch
              %79 = sbr.rel target = $region42
            $region47: #{hnsw_classifier_forward.1} parent=39 // loop_exit
              _
            %s88 = ssub.s32 16, 1
            loop: start=0, step=1, limit=1
            $region48: #{hnsw_classifier_forward.1} parent=39 // loop_pre_header
              _
            $region49: #{hnsw_classifier_forward.1} parent=39 // loop_header
              %s90 = sphi 0, %s94
              %p91 = scmp.ge.s32.totalorder %s90, 1
              %s95 = sphi %s28, %s28
              %s96 = sphi [#allocation5], [#allocation5]
            $region50: #{hnsw_classifier_forward.1} parent=39 // loop_header_branch
              %93 = sbr.rel (%p91) target = $region54
            $region51: #{hnsw_classifier_forward.1} parent=39 // loop_body
              %v97 = vld [vmem:[%s95] sm:%s88]
              %98 = vst [vmem:[%s96] sm:%s88] %v97
              %v99 = vld [vmem:[%s95 + $0x8] sm:%s88]
              %100 = vst [vmem:[%s96 + $0x4] sm:%s88] %v99
              %v101 = vld [vmem:[%s95 + $0x10] sm:%s88]
              %102 = vst [vmem:[%s96 + $0x8] sm:%s88] %v101
              %v103 = vld [vmem:[%s95 + $0x18] sm:%s88]
              %104 = vst [vmem:[%s96 + $0xc] sm:%s88] %v103
              %v105 = vld [vmem:[%s95 + $0x20] sm:%s88]
              %106 = vst [vmem:[%s96 + $0x10] sm:%s88] %v105
              %v107 = vld [vmem:[%s95 + $0x28] sm:%s88]
              %108 = vst [vmem:[%s96 + $0x14] sm:%s88] %v107
              %v109 = vld [vmem:[%s95 + $0x30] sm:%s88]
              %110 = vst [vmem:[%s96 + $0x18] sm:%s88] %v109
              %v111 = vld [vmem:[%s95 + $0x38] sm:%s88]
              %112 = vst [vmem:[%s96 + $0x1c] sm:%s88] %v111
              %v113 = vld [vmem:[%s95 + $0x40] sm:%s88]
              %114 = vst [vmem:[%s96 + $0x20] sm:%s88] %v113
              %v115 = vld [vmem:[%s95 + $0x48] sm:%s88]
              %116 = vst [vmem:[%s96 + $0x24] sm:%s88] %v115
              %v117 = vld [vmem:[%s95 + $0x50] sm:%s88]
              %118 = vst [vmem:[%s96 + $0x28] sm:%s88] %v117
              %v119 = vld [vmem:[%s95 + $0x58] sm:%s88]
              %120 = vst [vmem:[%s96 + $0x2c] sm:%s88] %v119
              %v121 = vld [vmem:[%s95 + $0x60] sm:%s88]
              %122 = vst [vmem:[%s96 + $0x30] sm:%s88] %v121
              %v123 = vld [vmem:[%s95 + $0x68] sm:%s88]
              %124 = vst [vmem:[%s96 + $0x34] sm:%s88] %v123
              %v125 = vld [vmem:[%s95 + $0x70] sm:%s88]
              %126 = vst [vmem:[%s96 + $0x38] sm:%s88] %v125
              %v127 = vld [vmem:[%s95 + $0x78] sm:%s88]
              %128 = vst [vmem:[%s96 + $0x3c] sm:%s88] %v127
            $region52: #{hnsw_classifier_forward.1} parent=39 // loop_footer
              %s94 = sadd.s32 1, %s90
            $region53: #{hnsw_classifier_forward.1} parent=39 // loop_footer_branch
              %89 = sbr.rel target = $region49
            $region54: #{hnsw_classifier_forward.1} parent=39 // loop_exit
              _
          $region40: #{hnsw_classifier_forward.1} parent=24 // pred_fallthru
            _
        $region25: #{hnsw_classifier_forward.1} parent=20 // pred_fallthru
          _
        // Predicated region
        $region26: #{hnsw_classifier_forward.1} parent=20 // pred_check
          _
        $region27: #{hnsw_classifier_forward.1} parent=20 // pred_check_branch
          %34 = sbr.rel (0) target = $region29
        $region28: #{hnsw_classifier_forward.1} parent=20 // pred_region
          %s36 = ssub.s32 16, 1
          loop: start=0, step=1, limit=1
          $region30: #{hnsw_classifier_forward.1} parent=28 // loop_pre_header
            _
          $region31: #{hnsw_classifier_forward.1} parent=28 // loop_header
            %s38 = sphi 0, %s42
            %p39 = scmp.ge.s32.totalorder %s38, 1
            %s43 = sphi %s28, %s28
            %s44 = sphi [#allocation5], [#allocation5]
          $region32: #{hnsw_classifier_forward.1} parent=28 // loop_header_branch
            %41 = sbr.rel (%p39) target = $region36
          $region33: #{hnsw_classifier_forward.1} parent=28 // loop_body
            %v45 = vld [vmem:[%s43] sm:%s36]
            %46 = vst [vmem:[%s44] sm:%s36] %v45
            %v47 = vld [vmem:[%s43 + $0x8] sm:%s36]
            %48 = vst [vmem:[%s44 + $0x4] sm:%s36] %v47
            %v49 = vld [vmem:[%s43 + $0x10] sm:%s36]
            %50 = vst [vmem:[%s44 + $0x8] sm:%s36] %v49
            %v51 = vld [vmem:[%s43 + $0x18] sm:%s36]
            %52 = vst [vmem:[%s44 + $0xc] sm:%s36] %v51
            %v53 = vld [vmem:[%s43 + $0x20] sm:%s36]
            %54 = vst [vmem:[%s44 + $0x10] sm:%s36] %v53
            %v55 = vld [vmem:[%s43 + $0x28] sm:%s36]
            %56 = vst [vmem:[%s44 + $0x14] sm:%s36] %v55
            %v57 = vld [vmem:[%s43 + $0x30] sm:%s36]
            %58 = vst [vmem:[%s44 + $0x18] sm:%s36] %v57
            %v59 = vld [vmem:[%s43 + $0x38] sm:%s36]
            %60 = vst [vmem:[%s44 + $0x1c] sm:%s36] %v59
            %v61 = vld [vmem:[%s43 + $0x40] sm:%s36]
            %62 = vst [vmem:[%s44 + $0x20] sm:%s36] %v61
            %v63 = vld [vmem:[%s43 + $0x48] sm:%s36]
            %64 = vst [vmem:[%s44 + $0x24] sm:%s36] %v63
            %v65 = vld [vmem:[%s43 + $0x50] sm:%s36]
            %66 = vst [vmem:[%s44 + $0x28] sm:%s36] %v65
            %v67 = vld [vmem:[%s43 + $0x58] sm:%s36]
            %68 = vst [vmem:[%s44 + $0x2c] sm:%s36] %v67
            %v69 = vld [vmem:[%s43 + $0x60] sm:%s36]
            %70 = vst [vmem:[%s44 + $0x30] sm:%s36] %v69
            %v71 = vld [vmem:[%s43 + $0x68] sm:%s36]
            %72 = vst [vmem:[%s44 + $0x34] sm:%s36] %v71
            %v73 = vld [vmem:[%s43 + $0x70] sm:%s36]
            %74 = vst [vmem:[%s44 + $0x38] sm:%s36] %v73
            %v75 = vld [vmem:[%s43 + $0x78] sm:%s36]
            %76 = vst [vmem:[%s44 + $0x3c] sm:%s36] %v75
          $region34: #{hnsw_classifier_forward.1} parent=28 // loop_footer
            %s42 = sadd.s32 1, %s38
          $region35: #{hnsw_classifier_forward.1} parent=28 // loop_footer_branch
            %37 = sbr.rel target = $region31
          $region36: #{hnsw_classifier_forward.1} parent=28 // loop_exit
            _
        $region29: #{hnsw_classifier_forward.1} parent=20 // pred_fallthru
          _
      $region21: #{hnsw_classifier_forward.1} parent=16 // pred_fallthru
        _
      %129 = vnop
    $region17: #{hnsw_classifier_forward.1} parent=1 // pred_fallthru
      _
    // Predicated region
    $region55: #{hnsw_classifier_forward.1} parent=1 // pred_check
      _
    $region56: #{hnsw_classifier_forward.1} parent=1 // pred_check_branch
      %131 = sbr.rel (0) target = $region58
    $region57: #{hnsw_classifier_forward.1} parent=1 // pred_region
      %s132 = sld [smem:[#allocation4]]
      %p133 = scmp.lt.s32.totalorder %s132, 1
      %s134 = scalar_select %p133, %s132, 1
      %s135 = scalar_lea.vmem %s6, %s134
      %s136 = sld [smem:[#allocation4]]
    $region58: #{hnsw_classifier_forward.1} parent=1 // pred_fallthru
      _
    // Predicated region
    $region59: #{hnsw_classifier_forward.1} parent=1 // pred_check
      _
    $region60: #{hnsw_classifier_forward.1} parent=1 // pred_check_branch
      %138 = sbr.rel (0) target = $region62
    $region61: #{hnsw_classifier_forward.1} parent=1 // pred_region
      _
    $region62: #{hnsw_classifier_forward.1} parent=1 // pred_fallthru
      _
    %s139 = sld [smem:[#allocation4]]
    %p140 = scmp.lt.s32.totalorder %s139, 1
    %s141 = scalar_select %p140, %s139, 1
    %s142 = scalar_lea.vmem %s6, %s141
    %s143 = sld [smem:[#allocation4]]
    %s144 = sld [smem:[#allocation4]]
    %p145 = scmp.lt.s32.totalorder %s144, 1
    %s146 = scalar_select %p145, %s144, 1
    %s147 = scalar_lea.vmem %s6, %s146
    %s148 = sld [smem:[#allocation4]]
    %v149 = vld [vmem:[%s2] sm:$0xff]
    %v150 = vld [vmem:[%s2 + $0x8] sm:$0xff]
    %v151 = vld [vmem:[%s3] sm:$0xf]
    %v152 = vld [vmem:[%s3 + $0x4] sm:$0xf]
    %v153 = vld [vmem:[%s3 + $0x8] sm:$0xf]
    %v154 = vld [vmem:[%s3 + $0xc] sm:$0xf]
    %v155 = vld [vmem:[%s3 + $0x10] sm:$0xf]
    %v156 = vld [vmem:[%s3 + $0x14] sm:$0xf]
    %v157 = vld [vmem:[%s3 + $0x18] sm:$0xf]
    %v158 = vld [vmem:[%s3 + $0x1c] sm:$0xf]
    %v159 = vld [vmem:[%s3 + $0x20] sm:$0xf]
    %v160 = vld [vmem:[%s3 + $0x24] sm:$0xf]
    %v161 = vld [vmem:[%s3 + $0x28] sm:$0xf]
    %v162 = vld [vmem:[%s3 + $0x2c] sm:$0xf]
    %v163 = vld [vmem:[%s3 + $0x30] sm:$0xf]
    %v164 = vld [vmem:[%s3 + $0x34] sm:$0xf]
    %v165 = vld [vmem:[%s3 + $0x38] sm:$0xf]
    %v166 = vld [vmem:[%s3 + $0x3c] sm:$0xf]
    %v167 = vld [vmem:[%s3 + $0x40] sm:$0xf]
    %v168 = vld [vmem:[%s3 + $0x44] sm:$0xf]
    %v169 = vld [vmem:[%s3 + $0x48] sm:$0xf]
    %v170 = vld [vmem:[%s3 + $0x4c] sm:$0xf]
    %v171 = vld [vmem:[%s3 + $0x50] sm:$0xf]
    %v172 = vld [vmem:[%s3 + $0x54] sm:$0xf]
    %v173 = vld [vmem:[%s3 + $0x58] sm:$0xf]
    %v174 = vld [vmem:[%s3 + $0x5c] sm:$0xf]
    %v175 = vld [vmem:[%s3 + $0x60] sm:$0xf]
    %v176 = vld [vmem:[%s3 + $0x64] sm:$0xf]
    %v177 = vld [vmem:[%s3 + $0x68] sm:$0xf]
    %v178 = vld [vmem:[%s3 + $0x6c] sm:$0xf]
    %v179 = vld [vmem:[%s3 + $0x70] sm:$0xf]
    %v180 = vld [vmem:[%s3 + $0x74] sm:$0xf]
    %v181 = vld [vmem:[%s3 + $0x78] sm:$0xf]
    %v182 = vld [vmem:[%s3 + $0x7c] sm:$0xf]
    %v183 = vld [vmem:[%s4] sm:$0x1]
    %v185 = vperm.slane %v183, 0
    %v189 = vunpack.c.l.b16 %v149
    %v190 = vunpack.c.h.b16 %v149
    %v191 = vunpack.c.l.b16 %v150
    %v192 = vunpack.c.h.b16 %v150
    %v193 = vpack.c.b16 %v191, %v189
    %v194 = vpack.c.b16 %v192, %v190
    %v229 = vunpack.c.l.b16 %v151
    %v230 = vunpack.c.l.b16 %v152
    %v231 = vunpack.c.l.b16 %v153
    %v232 = vunpack.c.l.b16 %v154
    %v233 = vunpack.c.l.b16 %v155
    %v234 = vunpack.c.l.b16 %v156
    %v235 = vunpack.c.l.b16 %v157
    %v236 = vunpack.c.l.b16 %v158
    %v237 = vunpack.c.l.b16 %v159
    %v238 = vunpack.c.l.b16 %v160
    %v239 = vunpack.c.l.b16 %v161
    %v240 = vunpack.c.l.b16 %v162
    %v241 = vunpack.c.l.b16 %v163
    %v242 = vunpack.c.l.b16 %v164
    %v243 = vunpack.c.l.b16 %v165
    %v244 = vunpack.c.l.b16 %v166
    %v245 = vunpack.c.l.b16 %v167
    %v246 = vunpack.c.l.b16 %v168
    %v247 = vunpack.c.l.b16 %v169
    %v248 = vunpack.c.l.b16 %v170
    %v249 = vunpack.c.l.b16 %v171
    %v250 = vunpack.c.l.b16 %v172
    %v251 = vunpack.c.l.b16 %v173
    %v252 = vunpack.c.l.b16 %v174
    %v253 = vunpack.c.l.b16 %v175
    %v254 = vunpack.c.l.b16 %v176
    %v255 = vunpack.c.l.b16 %v177
    %v256 = vunpack.c.l.b16 %v178
    %v257 = vunpack.c.l.b16 %v179
    %v258 = vunpack.c.l.b16 %v180
    %v259 = vunpack.c.l.b16 %v181
    %v260 = vunpack.c.l.b16 %v182
    %v261 = vpack.c.b16 %v230, %v229
    %v262 = vpack.c.b16 %v232, %v231
    %v263 = vpack.c.b16 %v234, %v233
    %v264 = vpack.c.b16 %v236, %v235
    %v265 = vpack.c.b16 %v238, %v237
    %v266 = vpack.c.b16 %v240, %v239
    %v267 = vpack.c.b16 %v242, %v241
    %v268 = vpack.c.b16 %v244, %v243
    %v269 = vpack.c.b16 %v246, %v245
    %v270 = vpack.c.b16 %v248, %v247
    %v271 = vpack.c.b16 %v250, %v249
    %v272 = vpack.c.b16 %v252, %v251
    %v273 = vpack.c.b16 %v254, %v253
    %v274 = vpack.c.b16 %v256, %v255
    %v275 = vpack.c.b16 %v258, %v257
    %v276 = vpack.c.b16 %v260, %v259
    %293 = vmatpush.bf16.msra.mxu0 %v268
    %294 = vmatpush.bf16.msra.mxu0 %v267
    %295 = vmatpush.bf16.msra.mxu0 %v266
    %296 = vmatpush.bf16.msra.mxu0 %v265
    %297 = vmatpush.bf16.msra.mxu0 %v264
    %298 = vmatpush.bf16.msra.mxu0 %v263
    %299 = vmatpush.bf16.msra.mxu0 %v262
    %300 = vmatpush.bf16.msra.mxu0 %v261
    %301 = vmatmul.bf16.gmra.mxu0 %v193
    %v302 = vpop.f32.mrf.mxu0
    %v303 = vadd.f32 %v185, %v302
    %v304 = vpop.f32.mrf.mxu0
    %v305 = vadd.f32 %v185, %v304
    %306 = vdwg.mxu0
    %307 = vmatpush.bf16.msra.mxu0 %v276
    %308 = vmatpush.bf16.msra.mxu0 %v275
    %309 = vmatpush.bf16.msra.mxu0 %v274
    %310 = vmatpush.bf16.msra.mxu0 %v273
    %311 = vmatpush.bf16.msra.mxu0 %v272
    %312 = vmatpush.bf16.msra.mxu0 %v271
    %313 = vmatpush.bf16.msra.mxu0 %v270
    %314 = vmatpush.bf16.msra.mxu0 %v269
    %315 = vmatmul.bf16.gmra.mxu0 %v194
    %v316 = vpop.f32.mrf.mxu0
    %v317 = vadd.f32 %v303, %v316
    %v318 = vpop.f32.mrf.mxu0
    %v319 = vadd.f32 %v305, %v318
    %320 = vdwg.mxu0
    %v321 = vmax.f32 %v317, 0.0
    %v322 = vmax.f32 %v319, 0.0
    %s323 = sld [smem:[#allocation3]]
    %s324 = sadd.s32 %s323, 0
    %v325 = vlaneseq
    %v326 = vshrl.u32 %v325, 7
    %v327 = vadd.s32 %v326, 8
    %v328 = vlaneseq
    %v329 = vand.u32 %v328, 127
    %s330 = smul.u32 %s324, 2654435769
    %v331 = vmul.u32 %v326, 2246822507
    %v332 = vmul.u32 %v327, 2246822507
    %v333 = vstv %s330
    %v334 = vadd.s32 %v333, %v331
    %v335 = vadd.s32 %v333, %v332
    %v336 = vmul.u32 %v329, 3266489909
    %v337 = vadd.s32 %v334, %v336
    %v338 = vadd.s32 %v335, %v336
    %v339 = vshrl.u32 %v337, 16
    %v340 = vshrl.u32 %v338, 16
    %v341 = vxor.u32 %v337, %v339
    %v342 = vxor.u32 %v338, %v340
    %v343 = vmul.u32 %v341, 2146121005
    %v344 = vmul.u32 %v342, 2146121005
    %v345 = vshrl.u32 %v343, 15
    %v346 = vshrl.u32 %v344, 15
    %v347 = vxor.u32 %v343, %v345
    %v348 = vxor.u32 %v344, %v346
    %v349 = vmul.u32 %v347, 2221713035
    %v350 = vmul.u32 %v348, 2221713035
    %v351 = vshrl.u32 %v349, 16
    %v352 = vshrl.u32 %v350, 16
    %v353 = vxor.u32 %v349, %v351
    %v354 = vxor.u32 %v350, %v352
    %v355 = vand.u32 %v353, 2147483648
    %v356 = vand.u32 %v354, 2147483648
    %vm357 = vcmp.ne.s32.totalorder %v355, 0
    %vm358 = vcmp.ne.s32.totalorder %v356, 0
    %v359 = vmul.f32 %v321, 2.0
    %v360 = vmul.f32 %v322, 2.0
    %v361 = vsel %vm357, %v359, 0.0
    %v362 = vsel %vm358, %v360, 0.0
    %v363 = vpack.c.bf16 %v362, %v361
    %v364 = vld [vmem:[#allocation5] sm:$0xf]
    %v365 = vld [vmem:[#allocation5 + $0x4] sm:$0xf]
    %v366 = vld [vmem:[#allocation5 + $0x8] sm:$0xf]
    %v367 = vld [vmem:[#allocation5 + $0xc] sm:$0xf]
    %v368 = vld [vmem:[#allocation5 + $0x10] sm:$0xf]
    %v369 = vld [vmem:[#allocation5 + $0x14] sm:$0xf]
    %v370 = vld [vmem:[#allocation5 + $0x18] sm:$0xf]
    %v371 = vld [vmem:[#allocation5 + $0x1c] sm:$0xf]
    %v372 = vld [vmem:[#allocation5 + $0x20] sm:$0xf]
    %v373 = vld [vmem:[#allocation5 + $0x24] sm:$0xf]
    %v374 = vld [vmem:[#allocation5 + $0x28] sm:$0xf]
    %v375 = vld [vmem:[#allocation5 + $0x2c] sm:$0xf]
    %v376 = vld [vmem:[#allocation5 + $0x30] sm:$0xf]
    %v377 = vld [vmem:[#allocation5 + $0x34] sm:$0xf]
    %v378 = vld [vmem:[#allocation5 + $0x38] sm:$0xf]
    %v379 = vld [vmem:[#allocation5 + $0x3c] sm:$0xf]
    %v380 = vld [vmem:[%s147] sm:$0x1]
    %v382 = vperm.slane %v380, 0
    %v400 = vunpack.c.l.b16 %v364
    %v401 = vunpack.c.l.b16 %v365
    %v402 = vunpack.c.l.b16 %v366
    %v403 = vunpack.c.l.b16 %v367
    %v404 = vunpack.c.l.b16 %v368
    %v405 = vunpack.c.l.b16 %v369
    %v406 = vunpack.c.l.b16 %v370
    %v407 = vunpack.c.l.b16 %v371
    %v408 = vunpack.c.l.b16 %v372
    %v409 = vunpack.c.l.b16 %v373
    %v410 = vunpack.c.l.b16 %v374
    %v411 = vunpack.c.l.b16 %v375
    %v412 = vunpack.c.l.b16 %v376
    %v413 = vunpack.c.l.b16 %v377
    %v414 = vunpack.c.l.b16 %v378
    %v415 = vunpack.c.l.b16 %v379
    %v416 = vpack.c.b16 %v401, %v400
    %v417 = vpack.c.b16 %v403, %v402
    %v418 = vpack.c.b16 %v405, %v404
    %v419 = vpack.c.b16 %v407, %v406
    %v420 = vpack.c.b16 %v409, %v408
    %v421 = vpack.c.b16 %v411, %v410
    %v422 = vpack.c.b16 %v413, %v412
    %v423 = vpack.c.b16 %v415, %v414
    %432 = vmatpush.bf16.msra.mxu0 %v423
    %433 = vmatpush.bf16.msra.mxu0 %v422
    %434 = vmatpush.bf16.msra.mxu0 %v421
    %435 = vmatpush.bf16.msra.mxu0 %v420
    %436 = vmatpush.bf16.msra.mxu0 %v419
    %437 = vmatpush.bf16.msra.mxu0 %v418
    %438 = vmatpush.bf16.msra.mxu0 %v417
    %439 = vmatpush.bf16.msra.mxu0 %v416
    %440 = vmatmul.bf16.gmra.mxu0 %v363
    %v441 = vpop.f32.mrf.mxu0
    %v442 = vadd.f32 %v382, %v441
    %v443 = vpop.f32.mrf.mxu0
    %v444 = vadd.f32 %v382, %v443
    %445 = vdwg.mxu0
    %446 = vst [vmem:[#allocation6] sm:$0xff] %v442
    %447 = vst [vmem:[#allocation6 + $0x8] sm:$0xff] %v444
    %448 = vst [vmem:[#allocation8] sm:$0xff] %v361
    %449 = vst [vmem:[#allocation8 + $0x8] sm:$0xff] %v362
    // Predicated region
    $region63: #{hnsw_classifier_forward.1} parent=1 // pred_check
      _
    $region64: #{hnsw_classifier_forward.1} parent=1 // pred_check_branch
      %451 = sbr.rel (0) target = $region66
    $region65: #{hnsw_classifier_forward.1} parent=1 // pred_region
      %453 = vsyncadd [#allocation7], 0
      %s454 = sshll.u32 [#allocation6], 4
      %s455 = int_to_ptr.vmem [resolvable:$true] %s454
      %s456 = sshll.u32 %s7, 4
      %s457 = int_to_ptr.hbm [resolvable:$true] %s456
      %462 = dma.vmem_to_hbm [thread:$0]  %s455, 256, %s457, [#allocation7], 128, 128, 8
    $region66: #{hnsw_classifier_forward.1} parent=1 // pred_fallthru
      _
    // Predicated region
    $region67: #{hnsw_classifier_forward.1} parent=1 // pred_check
      _
    $region68: #{hnsw_classifier_forward.1} parent=1 // pred_check_branch
      %464 = sbr.rel (0) target = $region70
    $region69: #{hnsw_classifier_forward.1} parent=1 // pred_region
      %466 = vsyncadd [#allocation9], 0
      %s467 = sshll.u32 [#allocation8], 4
      %s468 = int_to_ptr.vmem [resolvable:$true] %s467
      %s469 = sshll.u32 %s8, 4
      %s470 = int_to_ptr.hbm [resolvable:$true] %s469
      %475 = dma.vmem_to_hbm [thread:$0]  %s468, 256, %s470, [#allocation9], 128, 128, 8
    $region70: #{hnsw_classifier_forward.1} parent=1 // pred_fallthru
      _
    // Predicated region
    $region71: #{hnsw_classifier_forward.1} parent=1 // pred_check
      _
    $region72: #{hnsw_classifier_forward.1} parent=1 // pred_check_branch
      %477 = sbr.rel (0) target = $region74
    $region73: #{hnsw_classifier_forward.1} parent=1 // pred_region
      %479 = dma.done [#allocation7], 256
    $region74: #{hnsw_classifier_forward.1} parent=1 // pred_fallthru
      _
    // Predicated region
    $region75: #{hnsw_classifier_forward.1} parent=1 // pred_check
      _
    $region76: #{hnsw_classifier_forward.1} parent=1 // pred_check_branch
      %481 = sbr.rel (0) target = $region78
    $region77: #{hnsw_classifier_forward.1} parent=1 // pred_region
      %483 = dma.done [#allocation9], 256
    $region78: #{hnsw_classifier_forward.1} parent=1 // pred_fallthru
      _
    %484 = vsyncpa [#allocation7], 1
    %485 = vsyncpa [#allocation9], 1

</llo_original>
